<compile_context>
chip_gen: v7x
topology: tpu7x:2x2x1
jax: 0.10.0
libtpu: 0.0.40
codegen_flags: <defaults>
</compile_context>

<pallas_src>
import functools
import math

import jax
import jax.numpy as jnp
from jax import lax
from jax.experimental import pallas as pl
from jax.experimental.pallas import tpu as pltpu


_KK_CONTRACT = (((1,), (1,)), ((), ()))  # contract last axis of both operands


def _lora_linear_kernel(*refs, has_lora, has_bias, nk):
    it = iter(refs)
    x_ref = next(it)
    w_ref = next(it)
    u_ref = next(it) if has_lora else None      # (tm, rp): scale*(x@A^T), precomputed
    b_ref = next(it) if has_lora else None      # (tn, rp)
    bias_ref = next(it) if has_bias else None   # (1, tn)
    o_ref = next(it)
    acc_ref = next(it) if nk > 1 else None      # (tm, tn) f32 scratch

    # (tm, tk) . (tn, tk) -> (tm, tn): K-K contraction, feeds MXU directly
    # (no in-kernel transpose).  f32 accumulation regardless of operand dtype.
    partial = lax.dot_general(
        x_ref[...], w_ref[...], _KK_CONTRACT,
        preferred_element_type=jnp.float32)

    def _finalize(acc):
        out = acc
        if has_lora:
            # (tm, rp) . (tn, rp) -> (tm, tn); scale already folded into u.
            out = out + lax.dot_general(
                u_ref[...], b_ref[...], _KK_CONTRACT,
                preferred_element_type=jnp.float32)
        if has_bias:
            out = out + bias_ref[...]
        o_ref[...] = out.astype(o_ref.dtype)

    if nk == 1:
        _finalize(partial)
    else:
        k = pl.program_id(2)

        @pl.when(k == 0)
        def _():
            acc_ref[...] = partial

        @pl.when(jnp.logical_and(k > 0, k < nk - 1))
        def _():
            acc_ref[...] += partial

        @pl.when(k == nk - 1)
        def _():
            _finalize(acc_ref[...] + partial)


def _round_up(v, m):
    return (v + m - 1) // m * m


def _pad2(a, rows, cols):
    pr, pc = rows - a.shape[0], cols - a.shape[1]
    if pr or pc:
        a = jnp.pad(a, ((0, pr), (0, pc)))
    return a


def _default_vmem_limit():
    cap = 128 * 1024 * 1024
    try:
        info = pltpu.get_tpu_info()
        cap = getattr(info, "vmem_capacity_bytes", None) or cap
    except Exception:
        pass
    # ~80% of physical, capped at 100 MiB: headroom on v7x (64 MiB physical),
    # room for big tiles on v5e/v6e (128 MiB physical).
    return min(int(cap * 0.8), 100 * 1024 * 1024)


def lora_linear_forward(x, weight, lora_A=None, lora_B=None, bias=None, *,
                        scale=1.0, enable_lora=True,
                        tm=512, tn=512, tk=512,
                        compute_dtype=jnp.bfloat16):
    """Pallas forward of the LoRA Linear module.

    x: (..., in_features); weight: (out_features, in_features);
    lora_A: (rank, in_features); lora_B: (out_features, rank);
    bias: (out_features,) or None.  Returns (..., out_features) in x.dtype.
    """
    N, K = weight.shape
    lead_shape = x.shape[:-1]
    x2d = x.reshape(-1, K)
    M = x2d.shape[0]
    has_bias = bias is not None
    has_lora = bool(enable_lora) and lora_A is not None and lora_B is not None
    out_dtype = x.dtype

    # ---- tile sizes (bf16 sublane packing => M tiles multiple of 16) --------
    sub = 16 if jnp.dtype(compute_dtype) == jnp.dtype(jnp.bfloat16) else 8
    tm = _round_up(min(tm, _round_up(M, sub)), sub)
    tn = _round_up(min(tn, _round_up(N, 128)), 128)
    tk = _round_up(min(tk, _round_up(K, 128)), 128)

    # Megacore: if there is only one M tile, make sure there are >= 2 N tiles
    # so both TensorCores (v7x) get work along a parallel axis.
    np_base = _round_up(N, 128)
    if _round_up(M, sub) <= tm and tn >= np_base and np_base >= 256:
        tn = _round_up((np_base + 1) // 2, 128)

    Mp, Np, Kp = _round_up(M, tm), _round_up(N, tn), _round_up(K, tk)
    grid = (Mp // tm, Np // tn, Kp // tk)
    nk = grid[2]

    # ---- host-side cast (once) + pad only when needed -----------------------
    x_p = _pad2(x2d.astype(compute_dtype), Mp, Kp)
    w_p = _pad2(weight.astype(compute_dtype), Np, Kp)

    in_specs = [
        pl.BlockSpec((tm, tk), lambda i, j, k: (i, k)),
        pl.BlockSpec((tn, tk), lambda i, j, k: (j, k)),
    ]
    args = [x_p, w_p]

    c_item = jnp.dtype(compute_dtype).itemsize
    flops = 2 * Mp * Np * Kp
    bytes_accessed = (x_p.size * c_item * grid[1]
                      + w_p.size * c_item * grid[0]
                      + Mp * Np * jnp.dtype(out_dtype).itemsize)

    if has_lora:
        r = lora_A.shape[0]
        rp = _round_up(r, 128)  # lane-align rank; zero pad is exact
        # Hoisted LoRA intermediate: u = scale * (x @ A^T), tiny (M, r) matmul
        # done once here instead of per (j, k) grid step inside the kernel.
        u = jnp.dot(x2d, lora_A.T, precision="highest",
                    preferred_element_type=jnp.float32) * scale
        u_p = _pad2(u.astype(compute_dtype), Mp, rp)
        b_p = _pad2(lora_B.astype(compute_dtype), Np, rp)
        in_specs += [
            pl.BlockSpec((tm, rp), lambda i, j, k: (i, 0)),  # resident per i
            pl.BlockSpec((tn, rp), lambda i, j, k: (j, 0)),
        ]
        args += [u_p, b_p]
        flops += 2 * Mp * Np * rp
        bytes_accessed += u_p.size * c_item + b_p.size * c_item * grid[0]

    if has_bias:
        bias_p = jnp.pad(bias.astype(jnp.float32), (0, Np - N)).reshape(1, Np)
        in_specs.append(pl.BlockSpec((1, tn), lambda i, j, k: (0, j)))
        args.append(bias_p)
        bytes_accessed += bias_p.size * 4 * grid[0]

    scratch_shapes = []
    if nk > 1:
        scratch_shapes.append(pltpu.VMEM((tm, tn), jnp.float32))

    kernel = functools.partial(
        _lora_linear_kernel, has_lora=has_lora, has_bias=has_bias, nk=nk)

    out_p = pl.pallas_call(
        kernel,
        out_shape=jax.ShapeDtypeStruct((Mp, Np), out_dtype),
        grid_spec=pltpu.PrefetchScalarGridSpec(
            num_scalar_prefetch=0,
            grid=grid,
            in_specs=in_specs,
            out_specs=pl.BlockSpec((tm, tn), lambda i, j, k: (i, j)),
            scratch_shapes=scratch_shapes),
        compiler_params=pltpu.CompilerParams(
            dimension_semantics=("parallel", "parallel", "arbitrary"),
            vmem_limit_bytes=_default_vmem_limit()),
        cost_estimate=pl.CostEstimate(
            flops=flops, transcendentals=0, bytes_accessed=int(bytes_accessed)),
    )(*args)

    return out_p[:M, :N].reshape(*lead_shape, N)


if __name__ == "__main__":
    key = jax.random.PRNGKey(0)

    def make_params(key, in_f, out_f, rank):
        k_w, k_b, k_a, k_lb = jax.random.split(key, 4)
        bound = 1.0 / math.sqrt(in_f)  # kaiming_uniform_(a=sqrt(5)) for Linear
        weight = jax.random.uniform(k_w, (out_f, in_f), jnp.float32, -bound, bound)
        bias = jax.random.uniform(k_b, (out_f,), jnp.float32, -bound, bound)
        lora_A = jax.random.normal(k_a, (rank, in_f), jnp.float32)
        # Module initializes lora_B to zeros; use small random values so the
        # fused LoRA path is exercised numerically.
        lora_B = 0.01 * jax.random.normal(k_lb, (out_f, rank), jnp.float32)
        return weight, bias, lora_A, lora_B

    def reference(x, weight, lora_A, lora_B, bias, scale, enable_lora,
                  mimic_bf16=False):
        def q(a):
            return a.astype(jnp.bfloat16).astype(jnp.float32) if mimic_bf16 else a
        y = jnp.einsum("...k,nk->...n", q(x), q(weight), precision="highest")
        if enable_lora:
            u = jnp.einsum("...k,rk->...r", x, lora_A, precision="highest") * scale
            y = y + jnp.einsum("...r,nr->...n", q(u), q(lora_B), precision="highest")
        if bias is not None:
            y = y + bias
        return y

    # --- test 1: small module-like shapes, exact f32 path --------------------
    batch, seq, in_f, out_f, rank, alpha = 2, 8, 32, 48, 4, 8
    scale = alpha / rank
    k1, k2, key = jax.random.split(key, 3)
    x = jax.random.normal(k1, (batch, seq, in_f), jnp.float32)
    weight, bias, lora_A, lora_B = make_params(k2, in_f, out_f, rank)
    y = lora_linear_forward(x, weight, lora_A, lora_B, bias,
                            scale=scale, enable_lora=True,
                            compute_dtype=jnp.float32)
    y = jax.block_until_ready(y)
    y_ref = reference(x, weight, lora_A, lora_B, bias, scale, True)
    assert y.shape == (batch, seq, out_f), y.shape
    assert jnp.allclose(y, y_ref, atol=1e-4, rtol=1e-4), float(
        jnp.max(jnp.abs(y - y_ref)))

    # --- test 2: real (1,2,2) grid (accumulator + finalize path), f32 --------
    in_f, out_f, rank, alpha = 256, 256, 4, 8
    scale = alpha / rank
    k1, k2, key = jax.random.split(key, 3)
    x = jax.random.normal(k1, (2, 8, in_f), jnp.float32)
    weight, bias, lora_A, lora_B = make_params(k2, in_f, out_f, rank)
    y = lora_linear_forward(x, weight, lora_A, lora_B, bias,
                            scale=scale, enable_lora=True,
                            tm=16, tn=128, tk=128,
                            compute_dtype=jnp.float32)
    y = jax.block_until_ready(y)
    y_ref = reference(x, weight, lora_A, lora_B, bias, scale, True)
    assert jnp.allclose(y, y_ref, atol=2e-4, rtol=2e-4), float(
        jnp.max(jnp.abs(y - y_ref)))

    # --- test 3: default bf16 compute path (inc. N padding + megacore split) -
    in_f, out_f, rank, alpha = 256, 384, 4, 8
    scale = alpha / rank
    k1, k2, key = jax.random.split(key, 3)
    x = jax.random.normal(k1, (2, 8, in_f), jnp.float32)
    weight, bias, lora_A, lora_B = make_params(k2, in_f, out_f, rank)
    y = lora_linear_forward(x, weight, lora_A, lora_B, bias,
                            scale=scale, enable_lora=True)
    y = jax.block_until_ready(y)
    y_ref = reference(x, weight, lora_A, lora_B, bias, scale, True,
                      mimic_bf16=True)
    assert y.shape == (2, 8, out_f), y.shape
    assert jnp.allclose(y, y_ref, atol=2e-3, rtol=2e-3), float(
        jnp.max(jnp.abs(y - y_ref)))

    # --- test 4: enable_lora=False, no bias (LoRA/bias operands never DMA'd) -
    y = lora_linear_forward(x, weight, None, None, None,
                            scale=scale, enable_lora=False,
                            compute_dtype=jnp.float32)
    y = jax.block_until_ready(y)
    y_ref = reference(x, weight, None, None, None, scale, False)
    assert jnp.allclose(y, y_ref, atol=2e-4, rtol=2e-4), float(
        jnp.max(jnp.abs(y - y_ref)))

    print("KERNEL_OK")
</pallas_src>

<mosaic_0001>
module attributes {stable_mosaic.version = 11 : i64} {
  func.func @_lora_linear_kernel(%arg0: i32, %arg1: i32, %arg2: i32, %arg3: memref<16x128xf32, #tpu.memory_space<vmem>>, %arg4: memref<128x128xf32, #tpu.memory_space<vmem>>, %arg5: memref<16x128xf32, #tpu.memory_space<vmem>>, %arg6: memref<128x128xf32, #tpu.memory_space<vmem>>, %arg7: memref<1x128xf32, #tpu.memory_space<vmem>>, %arg8: memref<16x128xf32, #tpu.memory_space<vmem>>) attributes {dimension_semantics = [#tpu.dimension_semantics<parallel>, #tpu.dimension_semantics<parallel>, #tpu.dimension_semantics<arbitrary>], iteration_bounds = array<i64: 1, 1, 1>, scalar_prefetch = 0 : i64, scratch_operands = 0 : i64, tpu.core_type = #tpu.core_type<tc>, window_params = [{transform_indices = @transform_0, window_bounds = array<i64: 16, 128>}, {transform_indices = @transform_1, window_bounds = array<i64: 128, 128>}, {transform_indices = @transform_2, window_bounds = array<i64: 16, 128>}, {transform_indices = @transform_3, window_bounds = array<i64: 128, 128>}, {transform_indices = @transform_4, window_bounds = array<i64: 1, 128>}, {transform_indices = @transform_5, window_bounds = array<i64: 16, 128>}]} {
    %c0 = arith.constant 0 : index
    %c0_0 = arith.constant 0 : index
    %0 = vector.load %arg3[%c0, %c0_0] : memref<16x128xf32, #tpu.memory_space<vmem>>, vector<16x128xf32>
    %c0_1 = arith.constant 0 : index
    %c0_2 = arith.constant 0 : index
    %1 = vector.load %arg4[%c0_1, %c0_2] : memref<128x128xf32, #tpu.memory_space<vmem>>, vector<128x128xf32>
    %cst = arith.constant dense<0.000000e+00> : vector<16x128xf32>
    %2 = tpu.matmul %0, %1, %cst {dimension_numbers = #tpu.dot_dimension_numbers<[1], [1], [0], [0], [0, 0, 1, 0], [], []>} : vector<16x128xf32>, vector<128x128xf32>, vector<16x128xf32> -> vector<16x128xf32>
    %c0_3 = arith.constant 0 : index
    %c0_4 = arith.constant 0 : index
    %3 = vector.load %arg5[%c0_3, %c0_4] : memref<16x128xf32, #tpu.memory_space<vmem>>, vector<16x128xf32>
    %c0_5 = arith.constant 0 : index
    %c0_6 = arith.constant 0 : index
    %4 = vector.load %arg6[%c0_5, %c0_6] : memref<128x128xf32, #tpu.memory_space<vmem>>, vector<128x128xf32>
    %cst_7 = arith.constant dense<0.000000e+00> : vector<16x128xf32>
    %5 = tpu.matmul %3, %4, %cst_7 {dimension_numbers = #tpu.dot_dimension_numbers<[1], [1], [0], [0], [0, 0, 1, 0], [], []>} : vector<16x128xf32>, vector<128x128xf32>, vector<16x128xf32> -> vector<16x128xf32>
    %6 = arith.addf %2, %5 : vector<16x128xf32>
    %c0_8 = arith.constant 0 : index
    %c0_9 = arith.constant 0 : index
    %7 = vector.load %arg7[%c0_8, %c0_9] : memref<1x128xf32, #tpu.memory_space<vmem>>, vector<1x128xf32>
    %8 = vector.broadcast %7 : vector<1x128xf32> to vector<16x128xf32>
    %9 = arith.addf %6, %8 : vector<16x128xf32>
    %c0_10 = arith.constant 0 : index
    %c0_11 = arith.constant 0 : index
    %10 = vector.load %arg8[%c0_10, %c0_11] : memref<16x128xf32, #tpu.memory_space<vmem>>, vector<16x128xf32>
    tpu.vector_store %arg8[%c0_10, %c0_11], %9 {strides = array<i32>} : memref<16x128xf32, #tpu.memory_space<vmem>>, vector<16x128xf32>,
    return
  }
  func.func @transform_0(%arg0: i32, %arg1: i32, %arg2: i32) -> (i32, i32) {
    %c0_i32 = arith.constant 0 : i32
    return %arg0, %arg2 : i32, i32
  }
  func.func @transform_1(%arg0: i32, %arg1: i32, %arg2: i32) -> (i32, i32) {
    %c0_i32 = arith.constant 0 : i32
    return %arg1, %arg2 : i32, i32
  }
  func.func @transform_2(%arg0: i32, %arg1: i32, %arg2: i32) -> (i32, i32) {
    %c0_i32 = arith.constant 0 : i32
    %c0_i32_0 = arith.constant 0 : i32
    return %arg0, %c0_i32 : i32, i32
  }
  func.func @transform_3(%arg0: i32, %arg1: i32, %arg2: i32) -> (i32, i32) {
    %c0_i32 = arith.constant 0 : i32
    %c0_i32_0 = arith.constant 0 : i32
    return %arg1, %c0_i32 : i32, i32
  }
  func.func @transform_4(%arg0: i32, %arg1: i32, %arg2: i32) -> (i32, i32) {
    %c0_i32 = arith.constant 0 : i32
    %c0_i32_0 = arith.constant 0 : i32
    return %c0_i32, %arg1 : i32, i32
  }
  func.func @transform_5(%arg0: i32, %arg1: i32, %arg2: i32) -> (i32, i32) {
    %c0_i32 = arith.constant 0 : i32
    return %arg0, %arg1 : i32, i32
  }
}

</mosaic_0001>

<llo_original>
// kernel: tpu_custom_call.1
$region0: #{tpu_custom_call.1}
  #allocation0 [shape = 'u32[]', space=smem, size = 0x4, offset = 0x4, fixed_abs, tag = 'smem constant byte address 0x4 - core index']
  #allocation1 [shape = 'u32[144,128]{1,0:T(1,128)}', space=vmem, size = 0x12000, scoped, tag = 'internal scratch']
  %s0 = inlined_call_operand.hbm [shape: f32[16,128], index: 0, kind: input, shape index: {}]
  %s1 = inlined_call_operand.hbm [shape: f32[128,128], index: 1, kind: input, shape index: {}]
  %s2 = inlined_call_operand.hbm [shape: f32[16,128], index: 2, kind: input, shape index: {}]
  %s3 = inlined_call_operand.hbm [shape: f32[128,128], index: 3, kind: input, shape index: {}]
  %s4 = inlined_call_operand.hbm [shape: f32[1,128], index: 4, kind: input, shape index: {}]
  %s5 = inlined_call_operand.hbm [shape: f32[16,128], index: 5, kind: output, shape index: {}]
  %s6 = sld [smem:[#allocation0]]
  $region50: #{tpu_custom_call.1} parent=0
    _
  %s8 = ssub.s32 1, %s6
  %s9 = scalar_select 0, %s8, %s6
  $region1: #{tpu_custom_call.1} parent=0
    #allocation2 [shape = 'u8[8192]{0}', space=vmem, size = 0x2000, scoped, tag = 'input window, operand 0, single buffered']
    #allocation3 [shape = 's32[1]{0}', space=sflag, size = 0x4, scoped, tag = 'scoped memory for tpu_custom_call.1']
    #allocation4 [shape = 's32[1]{0}', space=sflag, size = 0x4, scoped, tag = 'scoped memory for tpu_custom_call.1']
    #allocation5 [shape = 'u8[65536]{0}', space=vmem, size = 0x10000, scoped, tag = 'input window, operand 1, single buffered']
    #allocation6 [shape = 's32[1]{0}', space=sflag, size = 0x4, scoped, tag = 'scoped memory for tpu_custom_call.1']
    #allocation7 [shape = 'u8[8192]{0}', space=vmem, size = 0x2000, scoped, tag = 'input window, operand 2, single buffered']
    #allocation8 [shape = 'u8[65536]{0}', space=vmem, size = 0x10000, scoped, tag = 'input window, operand 3, single buffered']
    #allocation9 [shape = 's32[1]{0}', space=sflag, size = 0x4, scoped, tag = 'scoped memory for tpu_custom_call.1']
    #allocation10 [shape = 'u8[512]{0}', space=vmem, size = 0x400, scoped, tag = 'input window, operand 4, single buffered']
    #allocation11 [shape = 'u8[8192]{0}', space=vmem, size = 0x2000, scoped, tag = 'output window, operand 0, single buffered']
    %10 = vsyncpa [#allocation3], 0
    %11 = vsyncpa [#allocation6], 0
    %12 = vsyncpa [#allocation9], 0
    %13 = vsyncpa [#allocation4], 0
    // Predicated region
    $region2: #{tpu_custom_call.1} parent=1 // pred_check
      _
    $region3: #{tpu_custom_call.1} parent=1 // pred_check_branch
      %15 = sbr.rel (0) target = $region5
    $region4: #{tpu_custom_call.1} parent=1 // pred_region
      %s17 = ssub.s32 256, 256
      %18 = vsyncadd [#allocation3], %s17
      %s19 = sshll.u32 [#allocation2], 4
      %s20 = int_to_ptr.vmem [resolvable:$true] %s19
      %25 = dma.hbm_to_vmem [thread:$0]  %s0, 256, %s20, [#allocation3], 128, 128, 8
    $region5: #{tpu_custom_call.1} parent=1 // pred_fallthru
      _
    // Predicated region
    $region6: #{tpu_custom_call.1} parent=1 // pred_check
      _
    $region7: #{tpu_custom_call.1} parent=1 // pred_check_branch
      %27 = sbr.rel (0) target = $region9
    $region8: #{tpu_custom_call.1} parent=1 // pred_region
      %s29 = ssub.s32 2048, 2048
      %30 = vsyncadd [#allocation6], %s29
      %s31 = sshll.u32 [#allocation5], 4
      %s32 = int_to_ptr.vmem [resolvable:$true] %s31
      %37 = dma.hbm_to_vmem [thread:$0]  %s1, 2048, %s32, [#allocation6], 128, 128, 8
    $region9: #{tpu_custom_call.1} parent=1 // pred_fallthru
      _
    // Predicated region
    $region10: #{tpu_custom_call.1} parent=1 // pred_check
      _
    $region11: #{tpu_custom_call.1} parent=1 // pred_check_branch
      %39 = sbr.rel (0) target = $region13
    $region12: #{tpu_custom_call.1} parent=1 // pred_region
      %s41 = ssub.s32 256, 256
      %42 = vsyncadd [#allocation6], %s41
      %s43 = sshll.u32 [#allocation7], 4
      %s44 = int_to_ptr.vmem [resolvable:$true] %s43
      %49 = dma.hbm_to_vmem [thread:$0]  %s2, 256, %s44, [#allocation6], 128, 128, 8
    $region13: #{tpu_custom_call.1} parent=1 // pred_fallthru
      _
    // Predicated region
    $region14: #{tpu_custom_call.1} parent=1 // pred_check
      _
    $region15: #{tpu_custom_call.1} parent=1 // pred_check_branch
      %51 = sbr.rel (0) target = $region17
    $region16: #{tpu_custom_call.1} parent=1 // pred_region
      %s53 = ssub.s32 2048, 2048
      %54 = vsyncadd [#allocation9], %s53
      %s55 = sshll.u32 [#allocation8], 4
      %s56 = int_to_ptr.vmem [resolvable:$true] %s55
      %61 = dma.hbm_to_vmem [thread:$0]  %s3, 2048, %s56, [#allocation9], 128, 128, 8
    $region17: #{tpu_custom_call.1} parent=1 // pred_fallthru
      _
    // Predicated region
    $region18: #{tpu_custom_call.1} parent=1 // pred_check
      _
    $region19: #{tpu_custom_call.1} parent=1 // pred_check_branch
      %63 = sbr.rel (0) target = $region21
    $region20: #{tpu_custom_call.1} parent=1 // pred_region
      %s65 = ssub.s32 16, 16
      %66 = vsyncadd [#allocation9], %s65
      %s68 = sshll.u32 [#allocation10], 4
      %s69 = int_to_ptr.vmem [resolvable:$true] %s68
      %71 = dma.hbm_to_vmem [thread:$0]  %s4, 16, %s69, [#allocation9]
    $region21: #{tpu_custom_call.1} parent=1 // pred_fallthru
      _
    // Predicated region
    $region22: #{tpu_custom_call.1} parent=1 // pred_check
      _
    $region23: #{tpu_custom_call.1} parent=1 // pred_check_branch
      %73 = sbr.rel (0) target = $region25
    $region24: #{tpu_custom_call.1} parent=1 // pred_region
      %74 = dma.done [#allocation3], 256
    $region25: #{tpu_custom_call.1} parent=1 // pred_fallthru
      _
    // Predicated region
    $region26: #{tpu_custom_call.1} parent=1 // pred_check
      _
    $region27: #{tpu_custom_call.1} parent=1 // pred_check_branch
      %76 = sbr.rel (0) target = $region29
    $region28: #{tpu_custom_call.1} parent=1 // pred_region
      %77 = dma.done [#allocation6], 2048
    $region29: #{tpu_custom_call.1} parent=1 // pred_fallthru
      _
    // Predicated region
    $region30: #{tpu_custom_call.1} parent=1 // pred_check
      _
    $region31: #{tpu_custom_call.1} parent=1 // pred_check_branch
      %79 = sbr.rel (0) target = $region33
    $region32: #{tpu_custom_call.1} parent=1 // pred_region
      %80 = dma.done [#allocation6], 256
    $region33: #{tpu_custom_call.1} parent=1 // pred_fallthru
      _
    // Predicated region
    $region34: #{tpu_custom_call.1} parent=1 // pred_check
      _
    $region35: #{tpu_custom_call.1} parent=1 // pred_check_branch
      %82 = sbr.rel (0) target = $region37
    $region36: #{tpu_custom_call.1} parent=1 // pred_region
      %83 = dma.done [#allocation9], 2048
    $region37: #{tpu_custom_call.1} parent=1 // pred_fallthru
      _
    // Predicated region
    $region38: #{tpu_custom_call.1} parent=1 // pred_check
      _
    $region39: #{tpu_custom_call.1} parent=1 // pred_check_branch
      %85 = sbr.rel (0) target = $region41
    $region40: #{tpu_custom_call.1} parent=1 // pred_region
      %86 = dma.done [#allocation9], 16
    $region41: #{tpu_custom_call.1} parent=1 // pred_fallthru
      _
    %v87 = vld [vmem:[#allocation2] sm:$0xff]
    %v88 = vld [vmem:[#allocation2 + $0x8] sm:$0xff]
    %v89 = vld [vmem:[#allocation5] sm:$0xff]
    %v90 = vld [vmem:[#allocation5 + $0x8] sm:$0xff]
    %v91 = vld [vmem:[#allocation5 + $0x10] sm:$0xff]
    %v92 = vld [vmem:[#allocation5 + $0x18] sm:$0xff]
    %v93 = vld [vmem:[#allocation5 + $0x20] sm:$0xff]
    %v94 = vld [vmem:[#allocation5 + $0x28] sm:$0xff]
    %v95 = vld [vmem:[#allocation5 + $0x30] sm:$0xff]
    %v96 = vld [vmem:[#allocation5 + $0x38] sm:$0xff]
    %v97 = vld [vmem:[#allocation5 + $0x40] sm:$0xff]
    %v98 = vld [vmem:[#allocation5 + $0x48] sm:$0xff]
    %v99 = vld [vmem:[#allocation5 + $0x50] sm:$0xff]
    %v100 = vld [vmem:[#allocation5 + $0x58] sm:$0xff]
    %v101 = vld [vmem:[#allocation5 + $0x60] sm:$0xff]
    %v102 = vld [vmem:[#allocation5 + $0x68] sm:$0xff]
    %v103 = vld [vmem:[#allocation5 + $0x70] sm:$0xff]
    %v104 = vld [vmem:[#allocation5 + $0x78] sm:$0xff]
    %v105 = vld [vmem:[#allocation7] sm:$0xff]
    %v106 = vld [vmem:[#allocation7 + $0x8] sm:$0xff]
    %v107 = vld [vmem:[#allocation8] sm:$0xff]
    %v108 = vld [vmem:[#allocation8 + $0x8] sm:$0xff]
    %v109 = vld [vmem:[#allocation8 + $0x10] sm:$0xff]
    %v110 = vld [vmem:[#allocation8 + $0x18] sm:$0xff]
    %v111 = vld [vmem:[#allocation8 + $0x20] sm:$0xff]
    %v112 = vld [vmem:[#allocation8 + $0x28] sm:$0xff]
    %v113 = vld [vmem:[#allocation8 + $0x30] sm:$0xff]
    %v114 = vld [vmem:[#allocation8 + $0x38] sm:$0xff]
    %v115 = vld [vmem:[#allocation8 + $0x40] sm:$0xff]
    %v116 = vld [vmem:[#allocation8 + $0x48] sm:$0xff]
    %v117 = vld [vmem:[#allocation8 + $0x50] sm:$0xff]
    %v118 = vld [vmem:[#allocation8 + $0x58] sm:$0xff]
    %v119 = vld [vmem:[#allocation8 + $0x60] sm:$0xff]
    %v120 = vld [vmem:[#allocation8 + $0x68] sm:$0xff]
    %v121 = vld [vmem:[#allocation8 + $0x70] sm:$0xff]
    %v122 = vld [vmem:[#allocation8 + $0x78] sm:$0xff]
    %123 = vmatprep.subr.mxu0 0.0
    %124 = vmatpush1.xpose.msra.mxu0 %v107
    %125 = vmatprep.subr.mxu0 0.0
    %126 = vmatpush1.xpose.msra.mxu0 %v108
    %127 = vmatprep.subr.mxu0 0.0
    %128 = vmatpush1.xpose.msra.mxu0 %v109
    %129 = vmatprep.subr.mxu0 0.0
    %130 = vmatpush1.xpose.msra.mxu0 %v110
    %131 = vmatprep.subr.mxu0 0.0
    %132 = vmatpush1.xpose.msra.mxu0 %v111
    %133 = vmatprep.subr.mxu0 0.0
    %134 = vmatpush1.xpose.msra.mxu0 %v112
    %135 = vmatprep.subr.mxu0 0.0
    %136 = vmatpush1.xpose.msra.mxu0 %v113
    %137 = vmatprep.subr.mxu0 0.0
    %138 = vmatpush1.xpose.msra.mxu0 %v114
    %139 = vmatprep.subr.mxu0 0.0
    %140 = vmatpush1.xpose.msra.mxu0 %v115
    %141 = vmatprep.subr.mxu0 0.0
    %142 = vmatpush1.xpose.msra.mxu0 %v116
    %143 = vmatprep.subr.mxu0 0.0
    %144 = vmatpush1.xpose.msra.mxu0 %v117
    %145 = vmatprep.subr.mxu0 0.0
    %146 = vmatpush1.xpose.msra.mxu0 %v118
    %147 = vmatprep.subr.mxu0 0.0
    %148 = vmatpush1.xpose.msra.mxu0 %v119
    %149 = vmatprep.subr.mxu0 0.0
    %150 = vmatpush1.xpose.msra.mxu0 %v120
    %151 = vmatprep.subr.mxu0 0.0
    %152 = vmatpush1.xpose.msra.mxu0 %v121
    %153 = vmatprep.subr.mxu0 0.0
    %154 = vmatpush1.xpose.msra.mxu0 %v122
    %155 = vmatprep.subr.mxu0 0.0
    %156 = vmatpush1.xpose.msra.mxu0 0.0
    %157 = vmatprep.subr.mxu0 0.0
    %158 = vmatpush1.xpose.msra.mxu0 0.0
    %159 = vmatprep.subr.mxu0 0.0
    %160 = vmatpush1.xpose.msra.mxu0 0.0
    %161 = vmatprep.subr.mxu0 0.0
    %162 = vmatpush1.xpose.msra.mxu0 0.0
    %163 = vmatprep.subr.mxu0 0.0
    %164 = vmatpush1.xpose.msra.mxu0 0.0
    %165 = vmatprep.subr.mxu0 0.0
    %166 = vmatpush1.xpose.msra.mxu0 0.0
    %167 = vmatprep.subr.mxu0 0.0
    %168 = vmatpush1.xpose.msra.mxu0 0.0
    %169 = vmatprep.subr.mxu0 0.0
    %170 = vmatpush1.xpose.msra.mxu0 0.0
    %171 = vmatprep.subr.mxu0 0.0
    %172 = vmatpush1.xpose.msra.mxu0 0.0
    %173 = vmatprep.subr.mxu0 0.0
    %174 = vmatpush1.xpose.msra.mxu0 0.0
    %175 = vmatprep.subr.mxu0 0.0
    %176 = vmatpush1.xpose.msra.mxu0 0.0
    %177 = vmatprep.subr.mxu0 0.0
    %178 = vmatpush1.xpose.msra.mxu0 0.0
    %179 = vmatprep.subr.mxu0 0.0
    %180 = vmatpush1.xpose.msra.mxu0 0.0
    %181 = vmatprep.subr.mxu0 0.0
    %182 = vmatpush1.xpose.msra.mxu0 0.0
    %183 = vmatprep.subr.mxu0 0.0
    %184 = vmatpush1.xpose.msra.mxu0 0.0
    %185 = vmatprep.subr.mxu0 0.0
    %186 = vmatpush1.xpose.msra.mxu0 0.0
    %187 = vmatprep.mubr.f32.mxu0 0.0
    %188 = vmatmul.mubr.f32.gmra.mrb[0].mxu0 %v105
    %v189 = vpop.f32.mrb[0].mxu0
    %v190 = vadd.f32 0.0, %v189
    %v191 = vpop.f32.mrb[0].mxu0
    %192 = vmatprep.mubr.f32.mxu0 0.0
    %193 = vmatmul.mubr.f32.gmra.mrb[0].mxu0 %v106
    %v194 = vpop.f32.mrb[0].mxu0
    %v195 = vadd.f32 0.0, %v194
    %v196 = vpop.f32.mrb[0].mxu0
    %197 = vdwg.mxu0
    %198 = vmatprep.subr.mxu0 0.0
    %199 = vmatpush1.xpose.msra.mxu0 %v89
    %200 = vmatprep.subr.mxu0 0.0
    %201 = vmatpush1.xpose.msra.mxu0 %v90
    %202 = vmatprep.subr.mxu0 0.0
    %203 = vmatpush1.xpose.msra.mxu0 %v91
    %204 = vmatprep.subr.mxu0 0.0
    %205 = vmatpush1.xpose.msra.mxu0 %v92
    %206 = vmatprep.subr.mxu0 0.0
    %207 = vmatpush1.xpose.msra.mxu0 %v93
    %208 = vmatprep.subr.mxu0 0.0
    %209 = vmatpush1.xpose.msra.mxu0 %v94
    %210 = vmatprep.subr.mxu0 0.0
    %211 = vmatpush1.xpose.msra.mxu0 %v95
    %212 = vmatprep.subr.mxu0 0.0
    %213 = vmatpush1.xpose.msra.mxu0 %v96
    %214 = vmatprep.subr.mxu0 0.0
    %215 = vmatpush1.xpose.msra.mxu0 %v97
    %216 = vmatprep.subr.mxu0 0.0
    %217 = vmatpush1.xpose.msra.mxu0 %v98
    %218 = vmatprep.subr.mxu0 0.0
    %219 = vmatpush1.xpose.msra.mxu0 %v99
    %220 = vmatprep.subr.mxu0 0.0
    %221 = vmatpush1.xpose.msra.mxu0 %v100
    %222 = vmatprep.subr.mxu0 0.0
    %223 = vmatpush1.xpose.msra.mxu0 %v101
    %224 = vmatprep.subr.mxu0 0.0
    %225 = vmatpush1.xpose.msra.mxu0 %v102
    %226 = vmatprep.subr.mxu0 0.0
    %227 = vmatpush1.xpose.msra.mxu0 %v103
    %228 = vmatprep.subr.mxu0 0.0
    %229 = vmatpush1.xpose.msra.mxu0 %v104
    %230 = vmatprep.subr.mxu0 0.0
    %231 = vmatpush1.xpose.msra.mxu0 0.0
    %232 = vmatprep.subr.mxu0 0.0
    %233 = vmatpush1.xpose.msra.mxu0 0.0
    %234 = vmatprep.subr.mxu0 0.0
    %235 = vmatpush1.xpose.msra.mxu0 0.0
    %236 = vmatprep.subr.mxu0 0.0
    %237 = vmatpush1.xpose.msra.mxu0 0.0
    %238 = vmatprep.subr.mxu0 0.0
    %239 = vmatpush1.xpose.msra.mxu0 0.0
    %240 = vmatprep.subr.mxu0 0.0
    %241 = vmatpush1.xpose.msra.mxu0 0.0
    %242 = vmatprep.subr.mxu0 0.0
    %243 = vmatpush1.xpose.msra.mxu0 0.0
    %244 = vmatprep.subr.mxu0 0.0
    %245 = vmatpush1.xpose.msra.mxu0 0.0
    %246 = vmatprep.subr.mxu0 0.0
    %247 = vmatpush1.xpose.msra.mxu0 0.0
    %248 = vmatprep.subr.mxu0 0.0
    %249 = vmatpush1.xpose.msra.mxu0 0.0
    %250 = vmatprep.subr.mxu0 0.0
    %251 = vmatpush1.xpose.msra.mxu0 0.0
    %252 = vmatprep.subr.mxu0 0.0
    %253 = vmatpush1.xpose.msra.mxu0 0.0
    %254 = vmatprep.subr.mxu0 0.0
    %255 = vmatpush1.xpose.msra.mxu0 0.0
    %256 = vmatprep.subr.mxu0 0.0
    %257 = vmatpush1.xpose.msra.mxu0 0.0
    %258 = vmatprep.subr.mxu0 0.0
    %259 = vmatpush1.xpose.msra.mxu0 0.0
    %260 = vmatprep.subr.mxu0 0.0
    %261 = vmatpush1.xpose.msra.mxu0 0.0
    %262 = vmatprep.mubr.f32.mxu0 0.0
    %263 = vmatmul.mubr.f32.gmra.mrb[0].mxu0 %v87
    %v264 = vpop.f32.mrb[0].mxu0
    %v265 = vadd.f32 %v190, %v264
    %v266 = vpop.f32.mrb[0].mxu0
    %267 = vmatprep.mubr.f32.mxu0 0.0
    %268 = vmatmul.mubr.f32.gmra.mrb[0].mxu0 %v88
    %v269 = vpop.f32.mrb[0].mxu0
    %v270 = vadd.f32 %v195, %v269
    %v271 = vpop.f32.mrb[0].mxu0
    %272 = vdwg.mxu0
    %v273 = vld [vmem:[#allocation10] sm:$0x1]
    %v275 = vlaneseq
    %v276 = vshrl.u32 %v275, 7
    %v277 = vsub.s32 0, %v276
    %v278 = vrot.slane %v273, %v277
    %v280 = vadd.f32 %v265, %v278
    %v281 = vadd.f32 %v270, %v278
    %282 = vst [vmem:[#allocation11] sm:$0xff] %v280
    %283 = vst [vmem:[#allocation11 + $0x8] sm:$0xff] %v281
    // Predicated region
    $region42: #{tpu_custom_call.1} parent=1 // pred_check
      _
    $region43: #{tpu_custom_call.1} parent=1 // pred_check_branch
      %285 = sbr.rel (0) target = $region45
    $region44: #{tpu_custom_call.1} parent=1 // pred_region
      %s287 = ssub.s32 256, 256
      %288 = vsyncadd [#allocation4], %s287
      %s289 = sshll.u32 [#allocation11], 4
      %s290 = int_to_ptr.vmem [resolvable:$true] %s289
      %295 = dma.vmem_to_hbm [thread:$0]  %s290, 256, %s5, [#allocation4], 128, 128, 8
    $region45: #{tpu_custom_call.1} parent=1 // pred_fallthru
      _
    // Predicated region
    $region46: #{tpu_custom_call.1} parent=1 // pred_check
      _
    $region47: #{tpu_custom_call.1} parent=1 // pred_check_branch
      %297 = sbr.rel (0) target = $region49
    $region48: #{tpu_custom_call.1} parent=1 // pred_region
      %298 = dma.done [#allocation4], 256
    $region49: #{tpu_custom_call.1} parent=1 // pred_fallthru
      _
    %299 = vsyncpa [#allocation3], 1
    %300 = vsyncpa [#allocation6], 1
    %301 = vsyncpa [#allocation9], 1
    %302 = vsyncpa [#allocation4], 1

</llo_original>
